<compile_context>
chip_gen: v7x
topology: tpu7x:2x2x1
jax: 0.10.0
libtpu: 0.0.40
codegen_flags: <defaults>
</compile_context>

<pallas_src>
import functools

import numpy as np
import jax
import jax.numpy as jnp
from jax import lax
from jax.experimental import pallas as pl
from jax.experimental.pallas import tpu as pltpu


def _round_up(x, m):
    return ((x + m - 1) // m) * m


def _static_int_or(x, fallback):
    """Return int(x) if x is concrete (eager wrapper), else the fallback (under jit)."""
    try:
        return int(x)
    except Exception:
        return int(fallback)


# ---------------------------------------------------------------------------
# B-spline basis (degree 1) — wrapper-side edge prep
# ---------------------------------------------------------------------------
def spline_basis_deg1(pseudo, kernel_size, is_open_spline):
    """pseudo: [E, D] in [0,1]. Returns basis [E, S], index [E, S] with S = 2**D."""
    E, D = pseudo.shape
    S = 2 ** D
    ks = jnp.asarray(kernel_size, jnp.int32)              # [D]
    iop = jnp.asarray(is_open_spline, jnp.int32)           # [D], 1 = open
    # degree 1: open spline scales by (k-1), closed by k
    v = pseudo * (ks - iop).astype(pseudo.dtype)            # [E, D]
    v_floor = jnp.floor(v)
    frac = v - v_floor
    # flattened kernel index offsets: sum_d idx_d * prod_{d'<d} ks[d']
    offs = jnp.concatenate(
        [jnp.ones((1,), jnp.int32), jnp.cumprod(ks[:-1]).astype(jnp.int32)]
    )
    basis_cols, index_cols = [], []
    for s in range(S):
        b = jnp.ones((E,), pseudo.dtype)
        i = jnp.zeros((E,), jnp.int32)
        for d in range(D):
            k_mod = (s >> d) & 1
            fd = frac[:, d]
            b = b * (fd if k_mod == 1 else (1.0 - fd))
            idx_d = v_floor[:, d].astype(jnp.int32) + k_mod
            idx_open = jnp.clip(idx_d, 0, ks[d] - 1)        # clamp boundary (pseudo == 1.0)
            idx_closed = idx_d % ks[d]                      # wrap closed splines
            idx_d = jnp.where(iop[d] == 1, idx_open, idx_closed)
            i = i + idx_d * offs[d]
        basis_cols.append(b)
        index_cols.append(i)
    return jnp.stack(basis_cols, axis=1), jnp.stack(index_cols, axis=1)


# ---------------------------------------------------------------------------
# Pallas kernel: fused message matmul + per-node-tile scatter + root + bias
# grid = (node tiles [parallel], per-tile edge blocks [arbitrary/reduction])
# ---------------------------------------------------------------------------
def _spline_conv_kernel(start_ref, count_ref,                 # scalar-prefetch (SMEM)
                        rows_ref, scaled_ref, x_ref, w2_ref, wroot_ref, bias_ref,
                        out_ref, acc_ref, *, n_tile, reassociate):
    i = pl.program_id(0)          # node tile
    j = pl.program_id(1)          # edge block within this tile's run (reduction axis)

    @pl.when(j == 0)
    def _init():
        acc_ref[...] = jnp.zeros_like(acc_ref)

    # Edge blocks beyond this tile's run are clamped repeats of the last block
    # (DMA skipped by Pallas) — only compute on the real ones.
    @pl.when(j < count_ref[i])
    def _accumulate():
        tile_lo = i * n_tile
        # tile-local one-hot scatter matrix via a column iota (cheap VALU)
        local = rows_ref[...] - tile_lo                               # [1, e_blk] int32
        iota_col = lax.broadcasted_iota(jnp.int32, (n_tile, 1), 0)    # [n_tile, 1]
        onehot = (local == iota_col).astype(jnp.bfloat16)             # [n_tile, e_blk]
        if reassociate:
            # (onehot @ scaled) @ w2 — cheaper when CKF < e_blk
            agg = jnp.dot(onehot, scaled_ref[...],
                          preferred_element_type=jnp.float32)         # [n_tile, CKF]
            acc_ref[...] += jnp.dot(agg.astype(jnp.bfloat16), w2_ref[...],
                                    preferred_element_type=jnp.float32)
        else:
            # onehot @ (scaled @ w2) — cheaper when CKF >= e_blk
            msg = jnp.dot(scaled_ref[...], w2_ref[...],
                          preferred_element_type=jnp.float32)          # [e_blk, FOUT_PAD]
            acc_ref[...] += jnp.dot(onehot, msg.astype(jnp.bfloat16),
                                    preferred_element_type=jnp.float32)

    @pl.when(j == pl.num_programs(1) - 1)
    def _finalize():
        root = jnp.dot(x_ref[...].astype(jnp.bfloat16), wroot_ref[...],
                       preferred_element_type=jnp.float32)
        out_ref[...] = (acc_ref[...] + root + bias_ref[...]).astype(out_ref.dtype)


# ---------------------------------------------------------------------------
# Wrapper
# ---------------------------------------------------------------------------
def spline_conv_pallas(x, row, col, pseudo, weight, kernel_size, is_open_spline, bias,
                       *, n_tile=128, e_blk=512):
    N, Fin = x.shape
    E = row.shape[0]
    K = int(np.prod(kernel_size))
    Fout = weight.shape[2]

    # ---- edge prep (basis, spread onto K slots, gather, 1/deg fold): O(E*K*Fin) ----
    basis, index = spline_basis_deg1(pseudo, kernel_size, is_open_spline)     # [E,S]
    alpha = jnp.einsum('es,esk->ek', basis,
                       jax.nn.one_hot(index, K, dtype=jnp.float32))           # [E,K]

    order = jnp.argsort(row)            # sort by target so each node tile owns a
    row_s = row[order].astype(jnp.int32)   # contiguous run of edge blocks
    col_s = col[order]
    alpha_s = alpha[order]

    deg = jnp.zeros((N,), jnp.float32).at[row].add(1.0)
    invdeg = 1.0 / jnp.clip(deg, 1.0)

    xe = x[col_s].astype(jnp.float32)                                          # [E, Fin]
    # fused per-edge operand: scaled[e, k*Fin+f] = alpha[e,k] * x[col[e], f] / deg(row[e])
    scaled = (alpha_s[:, :, None] * xe[:, None, :]).reshape(E, K * Fin)
    scaled = scaled * invdeg[row_s][:, None]

    # ---- padded tile sizes ----
    FOUT_PAD = _round_up(max(Fout, 128), 128)    # lane-dense output slab
    CKF = _round_up(K * Fin, 128)                # padded contraction (don't over-pad)
    n_tile = min(n_tile, _round_up(N, 8))
    # keep >= 2 node tiles so both TensorCores get work (megacore/v7x)
    while _round_up(N, n_tile) // n_tile < 2 and n_tile > 8:
        n_tile = max(8, _round_up(n_tile // 2, 8))
    N_pad = _round_up(N, n_tile)
    n_tiles = N_pad // n_tile

    e_blk = max(128, min(e_blk, _round_up(E, 128)))
    E_pad = _round_up(E, e_blk)
    n_eblk = E_pad // e_blk

    reassociate = bool(CKF < e_blk)              # static matmul-order choice

    # ---- padded / bf16 operands (f32 accumulation stays in the kernel) ----
    scaled_p = jnp.zeros((E_pad, CKF), jnp.bfloat16).at[:E, :K * Fin].set(
        scaled.astype(jnp.bfloat16))
    rows_flat = jnp.full((E_pad,), N_pad, jnp.int32).at[:E].set(row_s)
    rows_p = rows_flat.reshape(1, E_pad)
    x_p = jnp.zeros((N_pad, Fin), jnp.float32).at[:N, :].set(x.astype(jnp.float32))
    w2 = jnp.zeros((CKF, FOUT_PAD), jnp.bfloat16).at[:K * Fin, :Fout].set(
        weight[:K].reshape(K * Fin, Fout).astype(jnp.bfloat16))
    wroot = jnp.zeros((Fin, FOUT_PAD), jnp.bfloat16).at[:, :Fout].set(
        weight[K].astype(jnp.bfloat16))
    bias2d = jnp.zeros((1, FOUT_PAD), jnp.float32).at[0, :Fout].set(
        bias.astype(jnp.float32))

    # ---- per node tile: contiguous run of edge blocks (scalar prefetch) ----
    valid = jnp.arange(E_pad) < E
    blk_min = jnp.min(jnp.where(valid, rows_flat, jnp.int32(2**30)).reshape(n_eblk, e_blk),
                      axis=1)
    blk_max = jnp.max(jnp.where(valid, rows_flat, jnp.int32(-1)).reshape(n_eblk, e_blk),
                      axis=1)
    tile_lo = jnp.arange(n_tiles, dtype=jnp.int32) * n_tile
    intersect = (blk_max[None, :] >= tile_lo[:, None]) & \
                (blk_min[None, :] < (tile_lo[:, None] + n_tile))       # [n_tiles, n_eblk]
    tile_blk_count = jnp.sum(intersect, axis=1).astype(jnp.int32)
    tile_blk_start = jnp.argmax(intersect, axis=1).astype(jnp.int32)

    # tight grid extent when inputs are concrete; safe fallback (gated + DMA-skipped) under jit
    max_blocks = _static_int_or(jnp.max(tile_blk_count), n_eblk)
    max_blocks = int(max(1, min(max_blocks, n_eblk)))

    # ---- VMEM budget (double-buffered inputs/outputs + scratch, counted once) ----
    est = (2 * (e_blk * 4)                          # rows (int32)
           + 2 * (e_blk * CKF * 2)                  # scaled (bf16)
           + 2 * (n_tile * Fin * 4)                 # x (f32)
           + 2 * (CKF * FOUT_PAD * 2)               # w2 (bf16)
           + 2 * (Fin * FOUT_PAD * 2)               # wroot (bf16)
           + 2 * (FOUT_PAD * 4)                     # bias (f32)
           + 2 * (n_tile * FOUT_PAD * 4)            # out (f32)
           + (n_tile * FOUT_PAD * 4))               # acc scratch (f32)
    vmem_limit = int(min(48 * 2**20, max(16 * 2**20, est + (4 << 20))))

    def _blk(j, s, c, i):
        return s[i] + jnp.minimum(j, jnp.maximum(c[i] - 1, 0))

    grid = (n_tiles, max_blocks)
    grid_spec = pltpu.PrefetchScalarGridSpec(
        num_scalar_prefetch=2,
        grid=grid,
        in_specs=[
            # edge target ids — data-dependent block, clamped (repeat => DMA skipped)
            pl.BlockSpec((1, e_blk), lambda i, j, s, c: (0, _blk(j, s, c, i))),
            # spline-scaled edge features — same data-dependent block
            pl.BlockSpec((e_blk, CKF), lambda i, j, s, c: (_blk(j, s, c, i), 0)),
            pl.BlockSpec((n_tile, Fin), lambda i, j, *_: (i, 0)),      # node feats (root)
            pl.BlockSpec((CKF, FOUT_PAD), lambda i, j, *_: (0, 0)),    # fused spline weights
            pl.BlockSpec((Fin, FOUT_PAD), lambda i, j, *_: (0, 0)),    # root weight
            pl.BlockSpec((1, FOUT_PAD), lambda i, j, *_: (0, 0)),      # bias
        ],
        out_specs=pl.BlockSpec((n_tile, FOUT_PAD), lambda i, j, *_: (i, 0)),
        scratch_shapes=[pltpu.VMEM((n_tile, FOUT_PAD), jnp.float32)],
    )

    out_p = pl.pallas_call(
        functools.partial(_spline_conv_kernel, n_tile=n_tile, reassociate=reassociate),
        out_shape=jax.ShapeDtypeStruct((N_pad, FOUT_PAD), x.dtype),
        grid_spec=grid_spec,
        compiler_params=pltpu.CompilerParams(
            dimension_semantics=("parallel", "arbitrary"),
            vmem_limit_bytes=vmem_limit),
    )(tile_blk_start, tile_blk_count, rows_p, scaled_p, x_p, w2, wroot, bias2d)

    return out_p[:N, :Fout]


# ---------------------------------------------------------------------------
# Pure-JAX reference (direct gather / scatter form) for validation
# ---------------------------------------------------------------------------
def spline_conv_ref(x, row, col, pseudo, weight, kernel_size, is_open_spline, bias):
    N, Fin = x.shape
    K = int(np.prod(kernel_size))
    basis, index = spline_basis_deg1(pseudo, kernel_size, is_open_spline)
    xe = x[col]                                    # [E, Fin]
    we = weight[:K][index]                         # [E, S, Fin, Fout]
    msg = jnp.einsum('es,ef,esfo->eo', basis, xe, we)
    agg = jnp.zeros((N, weight.shape[2]), x.dtype).at[row].add(msg)
    deg = jnp.zeros((N,), x.dtype).at[row].add(1.0)
    out = agg / jnp.clip(deg, 1.0)[:, None] + x @ weight[K] + bias
    return out


if __name__ == "__main__":
    # Module config: SplineConv(in_features=8, out_features=16, dim=2, kernel_size=3)
    N, E = 16, 48
    in_features, out_features = 8, 16
    dim = 2
    kernel_size = [3, 3]           # repeat_to(3, dim)
    is_open_spline = [1, 1]        # repeat_to(True, dim)
    K = int(np.prod(kernel_size))  # 9

    key = jax.random.PRNGKey(0)
    k_row, k_col, k_ps, k_x, k_w, k_b = jax.random.split(key, 6)

    row = jax.random.randint(k_row, (E,), 0, N)               # target nodes
    col = jax.random.randint(k_col, (E,), 0, N)               # source nodes
    pseudo = jax.random.uniform(k_ps, (E, dim), jnp.float32)  # u(i,j) in [0,1)
    x = jax.random.normal(k_x, (N, in_features), jnp.float32)

    # reset_parameters(): uniform(-1/sqrt(size), 1/sqrt(size)), size = in*(K+1)
    bound = 1.0 / np.sqrt(in_features * (K + 1))
    weight = jax.random.uniform(k_w, (K + 1, in_features, out_features),
                                jnp.float32, -bound, bound)
    bias = jax.random.uniform(k_b, (out_features,), jnp.float32, -bound, bound)

    out = spline_conv_pallas(x, row, col, pseudo, weight,
                             kernel_size, is_open_spline, bias)
    out = jax.block_until_ready(out)

    ref = spline_conv_ref(x, row, col, pseudo, weight,
                          kernel_size, is_open_spline, bias)
    # bf16 matmul operands with f32 accumulation → loosened tolerance
    np.testing.assert_allclose(np.asarray(out), np.asarray(ref), rtol=2e-2, atol=2e-2)

    print("KERNEL_OK")
</pallas_src>

<mosaic_0001>
module attributes {stable_mosaic.version = 11 : i64} {
  func.func @_spline_conv_kernel(%arg0: i32, %arg1: i32, %arg2: memref<2xi32, #tpu.memory_space<smem>>, %arg3: memref<2xi32, #tpu.memory_space<smem>>, %arg4: memref<1x128xi32, #tpu.memory_space<vmem>>, %arg5: memref<128x128xbf16, #tpu.memory_space<vmem>>, %arg6: memref<8x8xf32, #tpu.memory_space<vmem>>, %arg7: memref<128x128xbf16, #tpu.memory_space<vmem>>, %arg8: memref<8x128xbf16, #tpu.memory_space<vmem>>, %arg9: memref<1x128xf32, #tpu.memory_space<vmem>>, %arg10: memref<8x128xf32, #tpu.memory_space<vmem>>, %arg11: memref<8x128xf32, #tpu.memory_space<vmem>>) attributes {dimension_semantics = [#tpu.dimension_semantics<parallel>, #tpu.dimension_semantics<arbitrary>], iteration_bounds = array<i64: 2, 1>, scalar_prefetch = 2 : i64, scratch_operands = 1 : i64, tpu.core_type = #tpu.core_type<tc>, window_params = [{transform_indices = @transform_0, window_bounds = array<i64: 1, 128>}, {transform_indices = @transform_1, window_bounds = array<i64: 128, 128>}, {transform_indices = @transform_2, window_bounds = array<i64: 8, 8>}, {pipeline_mode = #tpu.pipeline_mode<synchronous>, transform_indices = @transform_3, window_bounds = array<i64: 128, 128>}, {pipeline_mode = #tpu.pipeline_mode<synchronous>, transform_indices = @transform_4, window_bounds = array<i64: 8, 128>}, {pipeline_mode = #tpu.pipeline_mode<synchronous>, transform_indices = @transform_5, window_bounds = array<i64: 1, 128>}, {transform_indices = @transform_6, window_bounds = array<i64: 8, 128>}]} {
    %c0_i32 = arith.constant 0 : i32
    %0 = arith.cmpi eq, %arg1, %c0_i32 : i32
    %1 = arith.extui %0 : i1 to i32
    %c0_i32_0 = arith.constant 0 : i32
    %2 = arith.cmpi ne, %1, %c0_i32_0 : i32
    scf.if %2 {
      %cst = arith.constant 0.000000e+00 : f32
      %11 = vector.broadcast %cst : f32 to vector<8x128xf32>
      %c0 = arith.constant 0 : index
      %c0_4 = arith.constant 0 : index
      %12 = vector.load %arg11[%c0, %c0_4] : memref<8x128xf32, #tpu.memory_space<vmem>>, vector<8x128xf32>
      tpu.vector_store %arg11[%c0, %c0_4], %11 {strides = array<i32>} : memref<8x128xf32, #tpu.memory_space<vmem>>, vector<8x128xf32>,
    } else {
    }
    %3 = arith.index_cast %arg0 : i32 to index
    %4 = memref.load %arg3[%3] : memref<2xi32, #tpu.memory_space<smem>>
    %5 = arith.cmpi slt, %arg1, %4 : i32
    %6 = arith.extui %5 : i1 to i32
    %c0_i32_1 = arith.constant 0 : i32
    %7 = arith.cmpi ne, %6, %c0_i32_1 : i32
    scf.if %7 {
      %c8_i32 = arith.constant 8 : i32
      %11 = arith.muli %arg0, %c8_i32 : i32
      %c0 = arith.constant 0 : index
      %c0_4 = arith.constant 0 : index
      %12 = vector.load %arg4[%c0, %c0_4] : memref<1x128xi32, #tpu.memory_space<vmem>>, vector<1x128xi32>
      %13 = vector.broadcast %11 : i32 to vector<1x128xi32>
      %14 = arith.subi %12, %13 : vector<1x128xi32>
      %15 = tpu.iota {dimensions = array<i32: 0>} : vector<8x1xi32>
      %16 = vector.broadcast %14 : vector<1x128xi32> to vector<8x128xi32>
      %17 = vector.broadcast %15 : vector<8x1xi32> to vector<8x128xi32>
      %18 = arith.cmpi eq, %16, %17 : vector<8x128xi32>
      %19 = arith.extui %18 : vector<8x128xi1> to vector<8x128xi32>
      %20 = arith.sitofp %19 : vector<8x128xi32> to vector<8x128xf32>
      %21 = arith.truncf %20 : vector<8x128xf32> to vector<8x128xbf16>
      %c0_5 = arith.constant 0 : index
      %c0_6 = arith.constant 0 : index
      %22 = vector.load %arg5[%c0_5, %c0_6] : memref<128x128xbf16, #tpu.memory_space<vmem>>, vector<128x128xbf16>
      %c0_7 = arith.constant 0 : index
      %c0_8 = arith.constant 0 : index
      %23 = vector.load %arg7[%c0_7, %c0_8] : memref<128x128xbf16, #tpu.memory_space<vmem>>, vector<128x128xbf16>
      %cst = arith.constant dense<0.000000e+00> : vector<128x128xf32>
      %24 = tpu.matmul %22, %23, %cst {dimension_numbers = #tpu.dot_dimension_numbers<[1], [0], [0], [1], [0, 0, 1, 1], [], []>} : vector<128x128xbf16>, vector<128x128xbf16>, vector<128x128xf32> -> vector<128x128xf32>
      %c0_9 = arith.constant 0 : index
      %c0_10 = arith.constant 0 : index
      %25 = vector.load %arg11[%c0_9, %c0_10] : memref<8x128xf32, #tpu.memory_space<vmem>>, vector<8x128xf32>
      %26 = arith.truncf %24 : vector<128x128xf32> to vector<128x128xbf16>
      %cst_11 = arith.constant dense<0.000000e+00> : vector<8x128xf32>
      %27 = tpu.matmul %21, %26, %cst_11 {dimension_numbers = #tpu.dot_dimension_numbers<[1], [0], [0], [1], [0, 0, 1, 1], [], []>} : vector<8x128xbf16>, vector<128x128xbf16>, vector<8x128xf32> -> vector<8x128xf32>
      %28 = arith.addf %25, %27 : vector<8x128xf32>
      %c0_12 = arith.constant 0 : index
      %c0_13 = arith.constant 0 : index
      %29 = vector.load %arg11[%c0_12, %c0_13] : memref<8x128xf32, #tpu.memory_space<vmem>>, vector<8x128xf32>
      tpu.vector_store %arg11[%c0_12, %c0_13], %28 {strides = array<i32>} : memref<8x128xf32, #tpu.memory_space<vmem>>, vector<8x128xf32>,
    } else {
    }
    %c0_i32_2 = arith.constant 0 : i32
    %8 = arith.cmpi eq, %arg1, %c0_i32_2 : i32
    %9 = arith.extui %8 : i1 to i32
    %c0_i32_3 = arith.constant 0 : i32
    %10 = arith.cmpi ne, %9, %c0_i32_3 : i32
    scf.if %10 {
      %c0 = arith.constant 0 : index
      %c0_4 = arith.constant 0 : index
      %11 = vector.load %arg6[%c0, %c0_4] : memref<8x8xf32, #tpu.memory_space<vmem>>, vector<8x8xf32>
      %12 = arith.truncf %11 : vector<8x8xf32> to vector<8x8xbf16>
      %c0_5 = arith.constant 0 : index
      %c0_6 = arith.constant 0 : index
      %13 = vector.load %arg8[%c0_5, %c0_6] : memref<8x128xbf16, #tpu.memory_space<vmem>>, vector<8x128xbf16>
      %cst = arith.constant dense<0.000000e+00> : vector<8x128xf32>
      %14 = tpu.matmul %12, %13, %cst {dimension_numbers = #tpu.dot_dimension_numbers<[1], [0], [0], [1], [0, 0, 1, 1], [], []>} : vector<8x8xbf16>, vector<8x128xbf16>, vector<8x128xf32> -> vector<8x128xf32>
      %c0_7 = arith.constant 0 : index
      %c0_8 = arith.constant 0 : index
      %15 = vector.load %arg11[%c0_7, %c0_8] : memref<8x128xf32, #tpu.memory_space<vmem>>, vector<8x128xf32>
      %16 = arith.addf %15, %14 : vector<8x128xf32>
      %c0_9 = arith.constant 0 : index
      %c0_10 = arith.constant 0 : index
      %17 = vector.load %arg9[%c0_9, %c0_10] : memref<1x128xf32, #tpu.memory_space<vmem>>, vector<1x128xf32>
      %18 = vector.broadcast %17 : vector<1x128xf32> to vector<8x128xf32>
      %19 = arith.addf %16, %18 : vector<8x128xf32>
      %c0_11 = arith.constant 0 : index
      %c0_12 = arith.constant 0 : index
      %20 = vector.load %arg10[%c0_11, %c0_12] : memref<8x128xf32, #tpu.memory_space<vmem>>, vector<8x128xf32>
      tpu.vector_store %arg10[%c0_11, %c0_12], %19 {strides = array<i32>} : memref<8x128xf32, #tpu.memory_space<vmem>>, vector<8x128xf32>,
    } else {
    }
    return
  }
  func.func @transform_0(%arg0: i32, %arg1: i32, %arg2: memref<2xi32, #tpu.memory_space<smem>>, %arg3: memref<2xi32, #tpu.memory_space<smem>>) -> (i32, i32) {
    %0 = arith.index_cast %arg0 : i32 to index
    %1 = memref.load %arg2[%0] : memref<2xi32, #tpu.memory_space<smem>>
    %2 = arith.index_cast %arg0 : i32 to index
    %3 = memref.load %arg3[%2] : memref<2xi32, #tpu.memory_space<smem>>
    %c1_i32 = arith.constant 1 : i32
    %4 = arith.subi %3, %c1_i32 : i32
    %c0_i32 = arith.constant 0 : i32
    %5 = arith.maxsi %4, %c0_i32 : i32
    %6 = arith.minsi %arg1, %5 : i32
    %7 = arith.addi %1, %6 : i32
    %c0_i32_0 = arith.constant 0 : i32
    %c0_i32_1 = arith.constant 0 : i32
    return %c0_i32_0, %7 : i32, i32
  }
  func.func @transform_1(%arg0: i32, %arg1: i32, %arg2: memref<2xi32, #tpu.memory_space<smem>>, %arg3: memref<2xi32, #tpu.memory_space<smem>>) -> (i32, i32) {
    %0 = arith.index_cast %arg0 : i32 to index
    %1 = memref.load %arg2[%0] : memref<2xi32, #tpu.memory_space<smem>>
    %2 = arith.index_cast %arg0 : i32 to index
    %3 = memref.load %arg3[%2] : memref<2xi32, #tpu.memory_space<smem>>
    %c1_i32 = arith.constant 1 : i32
    %4 = arith.subi %3, %c1_i32 : i32
    %c0_i32 = arith.constant 0 : i32
    %5 = arith.maxsi %4, %c0_i32 : i32
    %6 = arith.minsi %arg1, %5 : i32
    %7 = arith.addi %1, %6 : i32
    %c0_i32_0 = arith.constant 0 : i32
    %c0_i32_1 = arith.constant 0 : i32
    return %7, %c0_i32_0 : i32, i32
  }
  func.func @transform_2(%arg0: i32, %arg1: i32, %arg2: memref<2xi32, #tpu.memory_space<smem>>, %arg3: memref<2xi32, #tpu.memory_space<smem>>) -> (i32, i32) {
    %c0_i32 = arith.constant 0 : i32
    %c0_i32_0 = arith.constant 0 : i32
    return %arg0, %c0_i32 : i32, i32
  }
  func.func @transform_3(%arg0: i32, %arg1: i32, %arg2: memref<2xi32, #tpu.memory_space<smem>>, %arg3: memref<2xi32, #tpu.memory_space<smem>>) -> (i32, i32) {
    %c0_i32 = arith.constant 0 : i32
    %c0_i32_0 = arith.constant 0 : i32
    %c0_i32_1 = arith.constant 0 : i32
    return %c0_i32, %c0_i32_0 : i32, i32
  }
  func.func @transform_4(%arg0: i32, %arg1: i32, %arg2: memref<2xi32, #tpu.memory_space<smem>>, %arg3: memref<2xi32, #tpu.memory_space<smem>>) -> (i32, i32) {
    %c0_i32 = arith.constant 0 : i32
    %c0_i32_0 = arith.constant 0 : i32
    %c0_i32_1 = arith.constant 0 : i32
    return %c0_i32, %c0_i32_0 : i32, i32
  }
  func.func @transform_5(%arg0: i32, %arg1: i32, %arg2: memref<2xi32, #tpu.memory_space<smem>>, %arg3: memref<2xi32, #tpu.memory_space<smem>>) -> (i32, i32) {
    %c0_i32 = arith.constant 0 : i32
    %c0_i32_0 = arith.constant 0 : i32
    %c0_i32_1 = arith.constant 0 : i32
    return %c0_i32, %c0_i32_0 : i32, i32
  }
  func.func @transform_6(%arg0: i32, %arg1: i32, %arg2: memref<2xi32, #tpu.memory_space<smem>>, %arg3: memref<2xi32, #tpu.memory_space<smem>>) -> (i32, i32) {
    %c0_i32 = arith.constant 0 : i32
    %c0_i32_0 = arith.constant 0 : i32
    return %arg0, %c0_i32 : i32, i32
  }
}

</mosaic_0001>

<llo_original>
// kernel: tpu_custom_call.1
$region0: #{tpu_custom_call.1}
  #allocation0 [shape = 'u32[]', space=smem, size = 0x4, offset = 0x4, fixed_abs, tag = 'smem constant byte address 0x4 - core index']
  #allocation1 [shape = 'u32[144,128]{1,0:T(1,128)}', space=vmem, size = 0x12000, scoped, tag = 'internal scratch']
  #allocation2 [shape = 'f32[8,128]{1,0:T(8,128)}', space=vmem, size = 0x1000, scoped, tag = 'scratch operand']
  #allocation3 [shape = 's32[1]{0}', space=sflag, size = 0x4, scoped, tag = 'scoped memory for tpu_custom_call.1']
  #allocation4 [shape = 'u8[512]{0}', space=smem, size = 0x200, scoped, tag = 'prefetched SMEM operand 0']
  #allocation5 [shape = 'u8[512]{0}', space=smem, size = 0x200, scoped, tag = 'prefetched SMEM operand 1']
  %s0 = inlined_call_operand.vmem [shape: s32[2], index: 0, kind: input, shape index: {}]
  %s1 = inlined_call_operand.vmem [shape: s32[2], index: 1, kind: input, shape index: {}]
  %s2 = inlined_call_operand.vmem [shape: s32[1,128], index: 2, kind: input, shape index: {}]
  %s3 = inlined_call_operand.hbm [shape: bf16[128,128], index: 3, kind: input, shape index: {}]
  %s4 = inlined_call_operand.vmem [shape: f32[16,8], index: 4, kind: input, shape index: {}]
  %s5 = inlined_call_operand.hbm [shape: bf16[128,128], index: 5, kind: input, shape index: {}]
  %s6 = inlined_call_operand.vmem [shape: bf16[8,128], index: 6, kind: input, shape index: {}]
  %s7 = inlined_call_operand.vmem [shape: f32[1,128], index: 7, kind: input, shape index: {}]
  %s8 = inlined_call_operand.hbm [shape: f32[16,128], index: 8, kind: output, shape index: {}]
  %s9 = sld [smem:[#allocation0]]
  $region77: #{tpu_custom_call.1} parent=0
    _
  %s11 = ssub.s32 1, %s9
  %s12 = scalar_select 0, %s11, %s9
  %s13 = sshll.u32 %s0, 4
  %s14 = int_to_ptr.vmem [resolvable:$true] %s13
  %16 = dma.vmem_to_smem %s14, 16, [#allocation4], [#allocation3]
  %s17 = sshll.u32 %s1, 4
  %s18 = int_to_ptr.vmem [resolvable:$true] %s17
  %20 = dma.vmem_to_smem %s18, 16, [#allocation5], [#allocation3]
  %21 = dma.done [#allocation3], 32
  %22 = sfence
  $region1: #{tpu_custom_call.1} parent=0
    #allocation6 [shape = 'u8[65536]{0}', space=vmem, size = 0x10000, scoped, tag = 'input window, operand 3']
    #allocation7 [shape = 's32[2]{0}', space=sflag, size = 0x8, scoped, tag = 'scoped memory for tpu_custom_call.1']
    #allocation8 [shape = 's32[2]{0}', space=sflag, size = 0x8, scoped, tag = 'scoped memory for tpu_custom_call.1']
    #allocation9 [shape = 'u8[32768]{0}', space=vmem, size = 0x8000, scoped, tag = 'input window, operand 5, single buffered']
    #allocation10 [shape = 's32[1]{0}', space=sflag, size = 0x4, scoped, tag = 'scoped memory for tpu_custom_call.1']
    #allocation11 [shape = 'u8[8192]{0}', space=vmem, size = 0x2000, scoped, tag = 'output window, operand 0']
    %23 = vsyncpa [#allocation7], 0
    %s24 = scalar_lea.sflag [#allocation7], 1
    %25 = vsyncpa %s24, 0
    %26 = vsyncpa [#allocation10], 0
    %27 = vsyncpa [#allocation8], 0
    %s28 = scalar_lea.sflag [#allocation8], 1
    %29 = vsyncpa %s28, 0
    loop: start=0, step=1, limit=4
    $region2: #{tpu_custom_call.1} parent=1 // loop_pre_header
      _
    $region3: #{tpu_custom_call.1} parent=1 // loop_header
      %s31 = sphi 0, %s35
      %p32 = scmp.ge.s32.totalorder %s31, 4
      %s38 = sphi 0, %s50
      %s39 = sphi 0, %s46
      %s40 = sphi 0, %s38
      %s41 = sphi 0, %s39
      %s42 = sphi 0, %s40
      %s43 = sphi 0, %s41
      %s69 = sphi 0, %s71
      %s72 = sphi 0, %s69
      %s73 = sphi 0, %s72
      %s89 = sphi 0, %s73
      %s111 = sphi 0, %s113
      %s114 = sphi 0, %s111
      %s115 = sphi 0, %s114
      %s131 = sphi 0, %s115
      %s137 = sphi 0, %s139
      %s140 = sphi 0, %s137
      %s141 = sphi 0, %s140
      %s157 = sphi 0, %s141
      %s161 = sphi 0, %s161
      %s163 = sphi 0, %s161
      %s164 = sphi 0, %s163
      %s178 = sphi 0, %s164
      %s182 = sphi 0, %s182
      %s184 = sphi 0, %s182
      %s185 = sphi 0, %s184
      %s199 = sphi 0, %s185
      %s203 = sphi 0, %s203
      %s205 = sphi 0, %s203
      %s206 = sphi 0, %s205
      %s220 = sphi 0, %s206
      %s226 = sphi 0, %s228
      %s229 = sphi 0, %s226
      %s230 = sphi 0, %s229
      %s246 = sphi 0, %s230
    $region4: #{tpu_custom_call.1} parent=1 // loop_header_branch
      %34 = sbr.rel (%p32) target = $region8
    $region5: #{tpu_custom_call.1} parent=1 // loop_body
      %s36 = ssub.s32 %s31, 1
      %s37 = ssub.s32 %s31, 2
      %s44 = sadd.s32 1, %s39
      %p45 = scmp.ge.s32.totalorder %s44, 1
      %s46 = scalar_select %p45, 0, %s44
      %s47 = sadd.s32 1, %s38
      %s48 = scalar_select %p45, %s47, %s38
      %p49 = scmp.ge.s32.totalorder %s48, 2
      %s50 = scalar_select %p49, 0, %s48
      %s51 = sld [smem:[#allocation4 + %s38]]
      %s52 = sld [smem:[#allocation5 + %s38]]
      %s53 = ssub.s32 %s52, 1
      %p54 = scmp.gt.s32.totalorder %s53, 0
      %s55 = scalar_select %p54, %s53, 0
      %p56 = scmp.lt.s32.totalorder %s39, %s55
      %s57 = scalar_select %p56, %s39, %s55
      %s58 = sadd.s32 %s51, %s57
      %s59 = sld [smem:[#allocation4 + %s50]]
      %s60 = sld [smem:[#allocation5 + %s50]]
      %s61 = ssub.s32 %s60, 1
      %p62 = scmp.gt.s32.totalorder %s61, 0
      %s63 = scalar_select %p62, %s61, 0
      %p64 = scmp.lt.s32.totalorder %s46, %s63
      %s65 = scalar_select %p64, %s46, %s63
      %s66 = sadd.s32 %s59, %s65
      %s67 = ssub.s32 %s58, %s66
      %p68 = scmp.eq.s32.totalorder %s67, 0
      %s70 = sadd.s32 %s69, 1
      %s71 = scalar_select %p68, %s69, %s70
      %p74 = pneg %p68
      %p75 = scmp.eq.s32.totalorder %s31, 1
      %p76 = por %p74, %p75
      %p77 = scmp.ne.s32.totalorder %s69, %s72
      %p78 = scmp.eq.s32.totalorder %s31, 0
      %p79 = por %p77, %p78
      %p80 = scmp.ne.s32.totalorder %s69, %s72
      %p81 = scmp.eq.s32.totalorder %s36, 1
      %p82 = por %p80, %p81
      %p83 = scmp.ne.s32.totalorder %s72, %s73
      %p84 = scmp.eq.s32.totalorder %s36, 0
      %p85 = por %p83, %p84
      %p86 = scmp.ne.s32.totalorder %s72, %s73
      %p87 = scmp.eq.s32.totalorder %s37, 1
      %p88 = por %p86, %p87
      %p90 = scmp.ne.s32.totalorder %s73, %s89
      %p91 = scmp.eq.s32.totalorder %s37, 0
      %p92 = por %p90, %p91
      %s93 = sld [smem:[#allocation4 + %s38]]
      %s94 = sld [smem:[#allocation5 + %s38]]
      %s95 = ssub.s32 %s94, 1
      %p96 = scmp.gt.s32.totalorder %s95, 0
      %s97 = scalar_select %p96, %s95, 0
      %p98 = scmp.lt.s32.totalorder %s39, %s97
      %s99 = scalar_select %p98, %s39, %s97
      %s100 = sadd.s32 %s93, %s99
      %s101 = sld [smem:[#allocation4 + %s50]]
      %s102 = sld [smem:[#allocation5 + %s50]]
      %s103 = ssub.s32 %s102, 1
      %p104 = scmp.gt.s32.totalorder %s103, 0
      %s105 = scalar_select %p104, %s103, 0
      %p106 = scmp.lt.s32.totalorder %s46, %s105
      %s107 = scalar_select %p106, %s46, %s105
      %s108 = sadd.s32 %s101, %s107
      %s109 = ssub.s32 %s100, %s108
      %p110 = scmp.eq.s32.totalorder %s109, 0
      %s112 = sadd.s32 %s111, 1
      %s113 = scalar_select %p110, %s111, %s112
      %p116 = pneg %p110
      %p117 = scmp.eq.s32.totalorder %s31, 1
      %p118 = por %p116, %p117
      %p119 = scmp.ne.s32.totalorder %s111, %s114
      %p120 = scmp.eq.s32.totalorder %s31, 0
      %p121 = por %p119, %p120
      %p122 = scmp.ne.s32.totalorder %s111, %s114
      %p123 = scmp.eq.s32.totalorder %s36, 1
      %p124 = por %p122, %p123
      %p125 = scmp.ne.s32.totalorder %s114, %s115
      %p126 = scmp.eq.s32.totalorder %s36, 0
      %p127 = por %p125, %p126
      %p128 = scmp.ne.s32.totalorder %s114, %s115
      %p129 = scmp.eq.s32.totalorder %s37, 1
      %p130 = por %p128, %p129
      %p132 = scmp.ne.s32.totalorder %s115, %s131
      %p133 = scmp.eq.s32.totalorder %s37, 0
      %p134 = por %p132, %p133
      %s135 = ssub.s32 %s38, %s50
      %p136 = scmp.eq.s32.totalorder %s135, 0
      %s138 = sadd.s32 %s137, 1
      %s139 = scalar_select %p136, %s137, %s138
      %p142 = pneg %p136
      %p143 = scmp.eq.s32.totalorder %s31, 1
      %p144 = por %p142, %p143
      %p145 = scmp.ne.s32.totalorder %s137, %s140
      %p146 = scmp.eq.s32.totalorder %s31, 0
      %p147 = por %p145, %p146
      %p148 = scmp.ne.s32.totalorder %s137, %s140
      %p149 = scmp.eq.s32.totalorder %s36, 1
      %p150 = por %p148, %p149
      %p151 = scmp.ne.s32.totalorder %s140, %s141
      %p152 = scmp.eq.s32.totalorder %s36, 0
      %p153 = por %p151, %p152
      %p154 = scmp.ne.s32.totalorder %s140, %s141
      %p155 = scmp.eq.s32.totalorder %s37, 1
      %p156 = por %p154, %p155
      %p158 = scmp.ne.s32.totalorder %s141, %s157
      %p159 = scmp.eq.s32.totalorder %s37, 0
      %p160 = por %p158, %p159
      %s162 = sadd.s32 %s161, 1
      %p165 = scmp.eq.s32.totalorder %s31, 1
      %p166 = scmp.ne.s32.totalorder %s161, %s163
      %p167 = scmp.eq.s32.totalorder %s31, 0
      %p168 = por %p166, %p167
      %p169 = scmp.ne.s32.totalorder %s161, %s163
      %p170 = scmp.eq.s32.totalorder %s36, 1
      %p171 = por %p169, %p170
      %p172 = scmp.ne.s32.totalorder %s163, %s164
      %p173 = scmp.eq.s32.totalorder %s36, 0
      %p174 = por %p172, %p173
      %p175 = scmp.ne.s32.totalorder %s163, %s164
      %p176 = scmp.eq.s32.totalorder %s37, 1
      %p177 = por %p175, %p176
      %p179 = scmp.ne.s32.totalorder %s164, %s178
      %p180 = scmp.eq.s32.totalorder %s37, 0
      %p181 = por %p179, %p180
      %s183 = sadd.s32 %s182, 1
      %p186 = scmp.eq.s32.totalorder %s31, 1
      %p187 = scmp.ne.s32.totalorder %s182, %s184
      %p188 = scmp.eq.s32.totalorder %s31, 0
      %p189 = por %p187, %p188
      %p190 = scmp.ne.s32.totalorder %s182, %s184
      %p191 = scmp.eq.s32.totalorder %s36, 1
      %p192 = por %p190, %p191
      %p193 = scmp.ne.s32.totalorder %s184, %s185
      %p194 = scmp.eq.s32.totalorder %s36, 0
      %p195 = por %p193, %p194
      %p196 = scmp.ne.s32.totalorder %s184, %s185
      %p197 = scmp.eq.s32.totalorder %s37, 1
      %p198 = por %p196, %p197
      %p200 = scmp.ne.s32.totalorder %s185, %s199
      %p201 = scmp.eq.s32.totalorder %s37, 0
      %p202 = por %p200, %p201
      %s204 = sadd.s32 %s203, 1
      %p207 = scmp.eq.s32.totalorder %s31, 1
      %p208 = scmp.ne.s32.totalorder %s203, %s205
      %p209 = scmp.eq.s32.totalorder %s31, 0
      %p210 = por %p208, %p209
      %p211 = scmp.ne.s32.totalorder %s203, %s205
      %p212 = scmp.eq.s32.totalorder %s36, 1
      %p213 = por %p211, %p212
      %p214 = scmp.ne.s32.totalorder %s205, %s206
      %p215 = scmp.eq.s32.totalorder %s36, 0
      %p216 = por %p214, %p215
      %p217 = scmp.ne.s32.totalorder %s205, %s206
      %p218 = scmp.eq.s32.totalorder %s37, 1
      %p219 = por %p217, %p218
      %p221 = scmp.ne.s32.totalorder %s206, %s220
      %p222 = scmp.eq.s32.totalorder %s37, 0
      %p223 = por %p221, %p222
      %s224 = ssub.s32 %s38, %s50
      %p225 = scmp.eq.s32.totalorder %s224, 0
      %s227 = sadd.s32 %s226, 1
      %s228 = scalar_select %p225, %s226, %s227
      %p231 = pneg %p225
      %p232 = scmp.eq.s32.totalorder %s31, 1
      %p233 = por %p231, %p232
      %p234 = scmp.ne.s32.totalorder %s226, %s229
      %p235 = scmp.eq.s32.totalorder %s31, 0
      %p236 = por %p234, %p235
      %p237 = scmp.ne.s32.totalorder %s226, %s229
      %p238 = scmp.eq.s32.totalorder %s36, 1
      %p239 = por %p237, %p238
      %p240 = scmp.ne.s32.totalorder %s229, %s230
      %p241 = scmp.eq.s32.totalorder %s36, 0
      %p242 = por %p240, %p241
      %p243 = scmp.ne.s32.totalorder %s229, %s230
      %p244 = scmp.eq.s32.totalorder %s37, 1
      %p245 = por %p243, %p244
      %p247 = scmp.ne.s32.totalorder %s230, %s246
      %p248 = scmp.eq.s32.totalorder %s37, 0
      %p249 = por %p247, %p248
      %p250 = scmp.le.s32.totalorder 1, %s31
      %p251 = scmp.lt.s32.totalorder %s31, 3
      %p252 = pnand %p250, %p251
      %p253 = pneg %p252
      // Predicated region
      $region9: #{tpu_custom_call.1} parent=5 // pred_check
        _
      $region10: #{tpu_custom_call.1} parent=5 // pred_check_branch
        %255 = sbr.rel (%p252) target = $region12
      $region11: #{tpu_custom_call.1} parent=5 // pred_region
        %s256 = ssub.s32 %s31, 1
        // Predicated region
        $region13: #{tpu_custom_call.1} parent=11 // pred_check
          %p257 = pneg %p174
        $region14: #{tpu_custom_call.1} parent=11 // pred_check_branch
          %259 = sbr.rel (%p257) target = $region16
        $region15: #{tpu_custom_call.1} parent=11 // pred_region
          %s261 = ssub.s32 1024, 1024
          %262 = vsyncadd [#allocation10], %s261
          %s263 = sshll.u32 [#allocation9], 4
          %s264 = int_to_ptr.vmem [resolvable:$true] %s263
          %269 = dma.hbm_to_vmem [thread:$0]  %s5, 1024, %s264, [#allocation10], 64, 64, 4
        $region16: #{tpu_custom_call.1} parent=11 // pred_fallthru
          _
        // Predicated region
        $region17: #{tpu_custom_call.1} parent=11 // pred_check
          %p270 = pneg %p195
        $region18: #{tpu_custom_call.1} parent=11 // pred_check_branch
          %272 = sbr.rel (%p270) target = $region20
        $region19: #{tpu_custom_call.1} parent=11 // pred_region
          _
        $region20: #{tpu_custom_call.1} parent=11 // pred_fallthru
          _
        // Predicated region
        $region21: #{tpu_custom_call.1} parent=11 // pred_check
          %p273 = pneg %p216
        $region22: #{tpu_custom_call.1} parent=11 // pred_check_branch
          %275 = sbr.rel (%p273) target = $region24
        $region23: #{tpu_custom_call.1} parent=11 // pred_region
          _
        $region24: #{tpu_custom_call.1} parent=11 // pred_fallthru
          _
      $region12: #{tpu_custom_call.1} parent=5 // pred_fallthru
        _
      %p276 = scmp.lt.s32.totalorder %s31, 2
      // Predicated region
      $region25: #{tpu_custom_call.1} parent=5 // pred_check
        %p277 = pneg %p276
      $region26: #{tpu_custom_call.1} parent=5 // pred_check_branch
        %279 = sbr.rel (%p277) target = $region28
      $region27: #{tpu_custom_call.1} parent=5 // pred_region
        // Predicated region
        $region29: #{tpu_custom_call.1} parent=27 // pred_check
          %p280 = pneg %p79
        $region30: #{tpu_custom_call.1} parent=27 // pred_check_branch
          %282 = sbr.rel (%p280) target = $region32
        $region31: #{tpu_custom_call.1} parent=27 // pred_region
          %s283 = sld [smem:[#allocation4 + %s38]]
          %s284 = sld [smem:[#allocation5 + %s38]]
          %s285 = ssub.s32 %s284, 1
          %p286 = scmp.gt.s32.totalorder %s285, 0
          %s287 = scalar_select %p286, %s285, 0
          %p288 = scmp.lt.s32.totalorder %s39, %s287
          %s289 = scalar_select %p288, %s39, %s287
          %s290 = sadd.s32 %s283, %s289
          %p291 = scmp.lt.s32.totalorder %s290, 0
          %s292 = scalar_select %p291, %s290, 0
          %s293 = scalar_lea.vmem %s2, %s292
          %s294 = sld [smem:[#allocation4 + %s38]]
          %s295 = sld [smem:[#allocation5 + %s38]]
          %s296 = ssub.s32 %s295, 1
          %p297 = scmp.gt.s32.totalorder %s296, 0
          %s298 = scalar_select %p297, %s296, 0
          %p299 = scmp.lt.s32.totalorder %s39, %s298
          %s300 = scalar_select %p299, %s39, %s298
          %s301 = sadd.s32 %s294, %s300
        $region32: #{tpu_custom_call.1} parent=27 // pred_fallthru
          _
        // Predicated region
        $region33: #{tpu_custom_call.1} parent=27 // pred_check
          %p302 = pneg %p121
        $region34: #{tpu_custom_call.1} parent=27 // pred_check_branch
          %304 = sbr.rel (%p302) target = $region36
        $region35: #{tpu_custom_call.1} parent=27 // pred_region
          %s305 = sand.u32 %s111, 1
          %s306 = scalar_lea.sflag [#allocation7], %s305
          %s307 = sand.u32 %s111, 1
          %s308 = smul.addr %s307, 64
          %s309 = scalar_lea.vmem [#allocation6], %s308
          %s310 = sld [smem:[#allocation4 + %s38]]
          %s311 = sld [smem:[#allocation5 + %s38]]
          %s312 = ssub.s32 %s311, 1
          %p313 = scmp.gt.s32.totalorder %s312, 0
          %s314 = scalar_select %p313, %s312, 0
          %p315 = scmp.lt.s32.totalorder %s39, %s314
          %s316 = scalar_select %p315, %s39, %s314
          %s317 = sadd.s32 %s310, %s316
          %s318 = smul.u32 16, %s317
          %s320 = ssub.s32 1024, 1024
          %321 = vsyncadd %s306, %s320
          %s322 = smul.addr %s318, 64
          %s323 = scalar_lea.hbm %s3, %s322
          %s324 = sshll.u32 %s309, 4
          %s325 = int_to_ptr.vmem [resolvable:$true] %s324
          %330 = dma.hbm_to_vmem [thread:$0]  %s323, 1024, %s325, %s306, 64, 64, 4
        $region36: #{tpu_custom_call.1} parent=27 // pred_fallthru
          _
        // Predicated region
        $region37: #{tpu_custom_call.1} parent=27 // pred_check
          %p331 = pneg %p147
        $region38: #{tpu_custom_call.1} parent=27 // pred_check_branch
          %333 = sbr.rel (%p331) target = $region40
        $region39: #{tpu_custom_call.1} parent=27 // pred_region
          %p334 = scmp.lt.s32.totalorder %s38, 1
          %s335 = scalar_select %p334, %s38, 1
          %s336 = smul.addr %s335, 8
          %s337 = scalar_lea.vmem %s4, %s336
        $region40: #{tpu_custom_call.1} parent=27 // pred_fallthru
          _
      $region28: #{tpu_custom_call.1} parent=5 // pred_fallthru
        _
      %p338 = scmp.le.s32.totalorder 1, %s31
      %p339 = scmp.lt.s32.totalorder %s31, 3
      %p340 = pnand %p338, %p339
      %p341 = pneg %p340
      // Predicated region
      $region41: #{tpu_custom_call.1} parent=5 // pred_check
        _
      $region42: #{tpu_custom_call.1} parent=5 // pred_check_branch
        %343 = sbr.rel (%p340) target = $region44
      $region43: #{tpu_custom_call.1} parent=5 // pred_region
        %s344 = ssub.s32 %s31, 1
        %s345 = sand.u32 %s114, 1
        %s346 = scalar_lea.sflag [#allocation7], %s345
        %s347 = sand.u32 %s114, 1
        %s348 = smul.addr %s347, 64
        %s349 = scalar_lea.vmem [#allocation6], %s348
        // Predicated region
        $region45: #{tpu_custom_call.1} parent=43 // pred_check
          %p350 = pneg %p127
        $region46: #{tpu_custom_call.1} parent=43 // pred_check_branch
          %352 = sbr.rel (%p350) target = $region48
        $region47: #{tpu_custom_call.1} parent=43 // pred_region
          %353 = dma.done %s346, 1024
        $region48: #{tpu_custom_call.1} parent=43 // pred_fallthru
          _
        // Predicated region
        $region49: #{tpu_custom_call.1} parent=43 // pred_check
          %p354 = pneg %p174
        $region50: #{tpu_custom_call.1} parent=43 // pred_check_branch
          %356 = sbr.rel (%p354) target = $region52
        $region51: #{tpu_custom_call.1} parent=43 // pred_region
          %357 = dma.done [#allocation10], 1024
        $region52: #{tpu_custom_call.1} parent=43 // pred_fallthru
          _
        %s358 = sld [smem:[#allocation4 + %s40]]
        %s359 = sld [smem:[#allocation5 + %s40]]
        %s360 = ssub.s32 %s359, 1
        %p361 = scmp.gt.s32.totalorder %s360, 0
        %s362 = scalar_select %p361, %s360, 0
        %p363 = scmp.lt.s32.totalorder %s41, %s362
        %s364 = scalar_select %p363, %s41, %s362
        %s365 = sadd.s32 %s358, %s364
        %p366 = scmp.lt.s32.totalorder %s365, 0
        %s367 = scalar_select %p366, %s365, 0
        %s368 = scalar_lea.vmem %s2, %s367
        %p369 = pneg %p85
        %p370 = pneg %p82
        %s371 = sand.u32 %s114, 1
        %s372 = scalar_lea.sflag [#allocation7], %s371
        %s373 = sand.u32 %s114, 1
        %s374 = smul.addr %s373, 64
        %s375 = scalar_lea.vmem [#allocation6], %s374
        %p376 = pneg %p127
        %p377 = pneg %p124
        %p378 = scmp.lt.s32.totalorder %s40, 1
        %s379 = scalar_select %p378, %s40, 1
        %s380 = smul.addr %s379, 8
        %s381 = scalar_lea.vmem %s4, %s380
        %p382 = pneg %p153
        %p383 = pneg %p150
        %p384 = pneg %p174
        %p385 = pneg %p171
        %p386 = pneg %p195
        %p387 = pneg %p192
        %p388 = pneg %p216
        %p389 = pneg %p213
        %p390 = pneg %p242
        %p391 = pneg %p239
        %s392 = sand.u32 %s229, 1
        %s393 = scalar_lea.sflag [#allocation8], %s392
        %s394 = sand.u32 %s229, 1
        %s395 = smul.addr %s394, 8
        %s396 = scalar_lea.vmem [#allocation11], %s395
        %s397 = sld [smem:[#allocation4 + %s40]]
        %s398 = sld [smem:[#allocation5 + %s40]]
        %s399 = ssub.s32 %s398, 1
        %p400 = scmp.gt.s32.totalorder %s399, 0
        %s401 = scalar_select %p400, %s399, 0
        %p402 = scmp.lt.s32.totalorder %s41, %s401
        %s403 = scalar_select %p402, %s41, %s401
        %s404 = sadd.s32 %s397, %s403
        %p405 = scmp.lt.s32.totalorder %s404, 0
        %s406 = scalar_select %p405, %s404, 0
        %s407 = scalar_lea.vmem %s2, %s406
        %s408 = sld [smem:[#allocation4 + %s40]]
        %s409 = sld [smem:[#allocation5 + %s40]]
        %s410 = ssub.s32 %s409, 1
        %p411 = scmp.gt.s32.totalorder %s410, 0
        %s412 = scalar_select %p411, %s410, 0
        %p413 = scmp.lt.s32.totalorder %s41, %s412
        %s414 = scalar_select %p413, %s41, %s412
        %s415 = sadd.s32 %s408, %s414
        %s416 = sld [smem:[#allocation4 + %s40]]
        %s417 = sld [smem:[#allocation5 + %s40]]
        %s418 = ssub.s32 %s417, 1
        %p419 = scmp.gt.s32.totalorder %s418, 0
        %s420 = scalar_select %p419, %s418, 0
        %p421 = scmp.lt.s32.totalorder %s41, %s420
        %s422 = scalar_select %p421, %s41, %s420
        %s423 = sadd.s32 %s416, %s422
        %s424 = smul.u32 16, %s423
        %p425 = scmp.lt.s32.totalorder %s40, 1
        %s426 = scalar_select %p425, %s40, 1
        %s427 = smul.addr %s426, 8
        %s428 = scalar_lea.vmem %s4, %s427
        %p430 = scmp.eq.s32.totalorder %s41, 0
        // Predicated region
        $region53: #{tpu_custom_call.1} parent=43 // pred_check
          %p431 = pneg %p430
        $region54: #{tpu_custom_call.1} parent=43 // pred_check_branch
          %433 = sbr.rel (%p431) target = $region56
        $region55: #{tpu_custom_call.1} parent=43 // pred_region
          %434 = vst [vmem:[#allocation2] sm:$0xff] 0.0
        $region56: #{tpu_custom_call.1} parent=43 // pred_fallthru
          _
        %s435 = sld [smem:[#allocation5 + %s40]]
        %p436 = scmp.lt.s32.totalorder %s41, %s435
        // Predicated region
        $region57: #{tpu_custom_call.1} parent=43 // pred_check
          %p437 = pneg %p436
        $region58: #{tpu_custom_call.1} parent=43 // pred_check_branch
          %439 = sbr.rel (%p437) target = $region60
        $region59: #{tpu_custom_call.1} parent=43 // pred_region
          %s440 = smul.u32 %s40, 8
          %v441 = vld [vmem:[%s407] sm:$0x1]
          %v442 = vstv %s440
          %v443 = vsub.s32 %v441, %v442
          %v444 = vlaneseq
          %v445 = vshrl.u32 %v444, 7
          %v446 = vlaneseq
          %v447 = vshrl.u32 %v446, 7
          %v448 = vsub.s32 0, %v447
          %v449 = vrot.slane %v443, %v448
          %vm450 = vcmp.eq.s32.totalorder %v449, %v445
          %v451 = vsel %vm450, 1, 0
          %v452 = vcvt.s32.f32 %v451
          %v453 = vpack.c.bf16 %v452, %v452
          %v454 = vld [vmem:[%s349] sm:$0xf]
          %v455 = vld [vmem:[%s349 + $0x4] sm:$0xf]
          %v456 = vld [vmem:[%s349 + $0x8] sm:$0xf]
          %v457 = vld [vmem:[%s349 + $0xc] sm:$0xf]
          %v458 = vld [vmem:[%s349 + $0x10] sm:$0xf]
          %v459 = vld [vmem:[%s349 + $0x14] sm:$0xf]
          %v460 = vld [vmem:[%s349 + $0x18] sm:$0xf]
          %v461 = vld [vmem:[%s349 + $0x1c] sm:$0xf]
          %v462 = vld [vmem:[%s349 + $0x20] sm:$0xf]
          %v463 = vld [vmem:[%s349 + $0x24] sm:$0xf]
          %v464 = vld [vmem:[%s349 + $0x28] sm:$0xf]
          %v465 = vld [vmem:[%s349 + $0x2c] sm:$0xf]
          %v466 = vld [vmem:[%s349 + $0x30] sm:$0xf]
          %v467 = vld [vmem:[%s349 + $0x34] sm:$0xf]
          %v468 = vld [vmem:[%s349 + $0x38] sm:$0xf]
          %v469 = vld [vmem:[%s349 + $0x3c] sm:$0xf]
          %v470 = vld [vmem:[#allocation9] sm:$0xf]
          %v471 = vld [vmem:[#allocation9 + $0x4] sm:$0xf]
          %v472 = vld [vmem:[#allocation9 + $0x8] sm:$0xf]
          %v473 = vld [vmem:[#allocation9 + $0xc] sm:$0xf]
          %v474 = vld [vmem:[#allocation9 + $0x10] sm:$0xf]
          %v475 = vld [vmem:[#allocation9 + $0x14] sm:$0xf]
          %v476 = vld [vmem:[#allocation9 + $0x18] sm:$0xf]
          %v477 = vld [vmem:[#allocation9 + $0x1c] sm:$0xf]
          %v478 = vld [vmem:[#allocation9 + $0x20] sm:$0xf]
          %v479 = vld [vmem:[#allocation9 + $0x24] sm:$0xf]
          %v480 = vld [vmem:[#allocation9 + $0x28] sm:$0xf]
          %v481 = vld [vmem:[#allocation9 + $0x2c] sm:$0xf]
          %v482 = vld [vmem:[#allocation9 + $0x30] sm:$0xf]
          %v483 = vld [vmem:[#allocation9 + $0x34] sm:$0xf]
          %v484 = vld [vmem:[#allocation9 + $0x38] sm:$0xf]
          %v485 = vld [vmem:[#allocation9 + $0x3c] sm:$0xf]
          %v502 = vunpack.c.l.b16 %v454
          %v503 = vunpack.c.l.b16 %v455
          %v504 = vunpack.c.l.b16 %v456
          %v505 = vunpack.c.l.b16 %v457
          %v506 = vunpack.c.l.b16 %v458
          %v507 = vunpack.c.l.b16 %v459
          %v508 = vunpack.c.l.b16 %v460
          %v509 = vunpack.c.l.b16 %v461
          %v510 = vunpack.c.l.b16 %v462
          %v511 = vunpack.c.l.b16 %v463
          %v512 = vunpack.c.l.b16 %v464
          %v513 = vunpack.c.l.b16 %v465
          %v514 = vunpack.c.l.b16 %v466
          %v515 = vunpack.c.l.b16 %v467
          %v516 = vunpack.c.l.b16 %v468
          %v517 = vunpack.c.l.b16 %v469
          %v518 = vpack.c.b16 %v503, %v502
          %v519 = vpack.c.b16 %v505, %v504
          %v520 = vpack.c.b16 %v507, %v506
          %v521 = vpack.c.b16 %v509, %v508
          %v522 = vpack.c.b16 %v511, %v510
          %v523 = vpack.c.b16 %v513, %v512
          %v524 = vpack.c.b16 %v515, %v514
          %v525 = vpack.c.b16 %v517, %v516
          %v550 = vunpack.c.l.b16 %v470
          %v551 = vunpack.c.l.b16 %v471
          %v552 = vunpack.c.l.b16 %v472
          %v553 = vunpack.c.l.b16 %v473
          %v554 = vunpack.c.l.b16 %v474
          %v555 = vunpack.c.l.b16 %v475
          %v556 = vunpack.c.l.b16 %v476
          %v557 = vunpack.c.l.b16 %v477
          %v558 = vunpack.c.l.b16 %v478
          %v559 = vunpack.c.l.b16 %v479
          %v560 = vunpack.c.l.b16 %v480
          %v561 = vunpack.c.l.b16 %v481
          %v562 = vunpack.c.l.b16 %v482
          %v563 = vunpack.c.l.b16 %v483
          %v564 = vunpack.c.l.b16 %v484
          %v565 = vunpack.c.l.b16 %v485
          %v566 = vpack.c.b16 %v551, %v550
          %v567 = vpack.c.b16 %v553, %v552
          %v568 = vpack.c.b16 %v555, %v554
          %v569 = vpack.c.b16 %v557, %v556
          %v570 = vpack.c.b16 %v559, %v558
          %v571 = vpack.c.b16 %v561, %v560
          %v572 = vpack.c.b16 %v563, %v562
          %v573 = vpack.c.b16 %v565, %v564
          %582 = vmatprep.subr.bf16.mxu0 0
          %583 = vmatpush1.bf16.msra.mxu0 %v566
          %584 = vmatprep.subr.bf16.mxu0 0
          %585 = vmatpush1.bf16.msra.mxu0 %v567
          %586 = vmatprep.subr.bf16.mxu0 0
          %587 = vmatpush1.bf16.msra.mxu0 %v568
          %588 = vmatprep.subr.bf16.mxu0 0
          %589 = vmatpush1.bf16.msra.mxu0 %v569
          %590 = vmatprep.subr.bf16.mxu0 0
          %591 = vmatpush1.bf16.msra.mxu0 %v570
          %592 = vmatprep.subr.bf16.mxu0 0
          %593 = vmatpush1.bf16.msra.mxu0 %v571
          %594 = vmatprep.subr.bf16.mxu0 0
          %595 = vmatpush1.bf16.msra.mxu0 %v572
          %596 = vmatprep.subr.bf16.mxu0 0
          %597 = vmatpush1.bf16.msra.mxu0 %v573
          %598 = vmatprep.subr.bf16.mxu0 0
          %599 = vmatpush1.bf16.msra.mxu0 0
          %600 = vmatprep.subr.bf16.mxu0 0
          %601 = vmatpush1.bf16.msra.mxu0 0
          %602 = vmatprep.subr.bf16.mxu0 0
          %603 = vmatpush1.bf16.msra.mxu0 0
          %604 = vmatprep.subr.bf16.mxu0 0
          %605 = vmatpush1.bf16.msra.mxu0 0
          %606 = vmatprep.subr.bf16.mxu0 0
          %607 = vmatpush1.bf16.msra.mxu0 0
          %608 = vmatprep.subr.bf16.mxu0 0
          %609 = vmatpush1.bf16.msra.mxu0 0
          %610 = vmatprep.subr.bf16.mxu0 0
          %611 = vmatpush1.bf16.msra.mxu0 0
          %612 = vmatprep.subr.bf16.mxu0 0
          %613 = vmatpush1.bf16.msra.mxu0 0
          %614 = vmatprep.mubr.bf16.mxu0 0
          %615 = vmatmul.mubr.bf16.gmra.mrb[0].mxu0 %v518
          %v616 = vpop.f32.mrb[0].mxu0
          %v617 = vadd.f32 0.0, %v616
          %v618 = vpop.f32.mrb[0].mxu0
          %v619 = vpop.f32.mrb[0].mxu0
          %v620 = vadd.f32 0.0, %v619
          %v621 = vpop.f32.mrb[0].mxu0
          %622 = vmatprep.mubr.bf16.mxu0 0
          %623 = vmatmul.mubr.bf16.gmra.mrb[0].mxu0 %v519
          %v624 = vpop.f32.mrb[0].mxu0
          %v625 = vadd.f32 0.0, %v624
          %v626 = vpop.f32.mrb[0].mxu0
          %v627 = vpop.f32.mrb[0].mxu0
          %v628 = vadd.f32 0.0, %v627
          %v629 = vpop.f32.mrb[0].mxu0
          %630 = vmatprep.mubr.bf16.mxu0 0
          %631 = vmatmul.mubr.bf16.gmra.mrb[0].mxu0 %v520
          %v632 = vpop.f32.mrb[0].mxu0
          %v633 = vadd.f32 0.0, %v632
          %v634 = vpop.f32.mrb[0].mxu0
          %v635 = vpop.f32.mrb[0].mxu0
          %v636 = vadd.f32 0.0, %v635
          %v637 = vpop.f32.mrb[0].mxu0
          %638 = vmatprep.mubr.bf16.mxu0 0
          %639 = vmatmul.mubr.bf16.gmra.mrb[0].mxu0 %v521
          %v640 = vpop.f32.mrb[0].mxu0
          %v641 = vadd.f32 0.0, %v640
          %v642 = vpop.f32.mrb[0].mxu0
          %v643 = vpop.f32.mrb[0].mxu0
          %v644 = vadd.f32 0.0, %v643
          %v645 = vpop.f32.mrb[0].mxu0
          %646 = vmatprep.mubr.bf16.mxu0 0
          %647 = vmatmul.mubr.bf16.gmra.mrb[0].mxu0 %v522
          %v648 = vpop.f32.mrb[0].mxu0
          %v649 = vadd.f32 0.0, %v648
          %v650 = vpop.f32.mrb[0].mxu0
          %v651 = vpop.f32.mrb[0].mxu0
          %v652 = vadd.f32 0.0, %v651
          %v653 = vpop.f32.mrb[0].mxu0
          %654 = vmatprep.mubr.bf16.mxu0 0
          %655 = vmatmul.mubr.bf16.gmra.mrb[0].mxu0 %v523
          %v656 = vpop.f32.mrb[0].mxu0
          %v657 = vadd.f32 0.0, %v656
          %v658 = vpop.f32.mrb[0].mxu0
          %v659 = vpop.f32.mrb[0].mxu0
          %v660 = vadd.f32 0.0, %v659
          %v661 = vpop.f32.mrb[0].mxu0
          %662 = vmatprep.mubr.bf16.mxu0 0
          %663 = vmatmul.mubr.bf16.gmra.mrb[0].mxu0 %v524
          %v664 = vpop.f32.mrb[0].mxu0
          %v665 = vadd.f32 0.0, %v664
          %v666 = vpop.f32.mrb[0].mxu0
          %v667 = vpop.f32.mrb[0].mxu0
          %v668 = vadd.f32 0.0, %v667
          %v669 = vpop.f32.mrb[0].mxu0
          %670 = vmatprep.mubr.bf16.mxu0 0
          %671 = vmatmul.mubr.bf16.gmra.mrb[0].mxu0 %v525
          %v672 = vpop.f32.mrb[0].mxu0
          %v673 = vadd.f32 0.0, %v672
          %v674 = vpop.f32.mrb[0].mxu0
          %v675 = vpop.f32.mrb[0].mxu0
          %v676 = vadd.f32 0.0, %v675
          %v677 = vpop.f32.mrb[0].mxu0
          %678 = vdwg.mxu0
          %v679 = vld [vmem:[#allocation2] sm:$0xff]
          %v680 = vpack.c.bf16 %v620, %v617
          %v681 = vpack.c.bf16 %v628, %v625
          %v682 = vpack.c.bf16 %v636, %v633
          %v683 = vpack.c.bf16 %v644, %v641
          %v684 = vpack.c.bf16 %v652, %v649
          %v685 = vpack.c.bf16 %v660, %v657
          %v686 = vpack.c.bf16 %v668, %v665
          %v687 = vpack.c.bf16 %v676, %v673
          %688 = vmatprep.subr.bf16.mxu0 0
          %689 = vmatpush1.bf16.msra.mxu0 %v680
          %690 = vmatprep.subr.bf16.mxu0 0
          %691 = vmatpush1.bf16.msra.mxu0 %v681
          %692 = vmatprep.subr.bf16.mxu0 0
          %693 = vmatpush1.bf16.msra.mxu0 %v682
          %694 = vmatprep.subr.bf16.mxu0 0
          %695 = vmatpush1.bf16.msra.mxu0 %v683
          %696 = vmatprep.subr.bf16.mxu0 0
          %697 = vmatpush1.bf16.msra.mxu0 %v684
          %698 = vmatprep.subr.bf16.mxu0 0
          %699 = vmatpush1.bf16.msra.mxu0 %v685
          %700 = vmatprep.subr.bf16.mxu0 0
          %701 = vmatpush1.bf16.msra.mxu0 %v686
          %702 = vmatprep.subr.bf16.mxu0 0
          %703 = vmatpush1.bf16.msra.mxu0 %v687
          %704 = vmatprep.subr.bf16.mxu0 0
          %705 = vmatpush1.bf16.msra.mxu0 0
          %706 = vmatprep.subr.bf16.mxu0 0
          %707 = vmatpush1.bf16.msra.mxu0 0
          %708 = vmatprep.subr.bf16.mxu0 0
          %709 = vmatpush1.bf16.msra.mxu0 0
          %710 = vmatprep.subr.bf16.mxu0 0
          %711 = vmatpush1.bf16.msra.mxu0 0
          %712 = vmatprep.subr.bf16.mxu0 0
          %713 = vmatpush1.bf16.msra.mxu0 0
          %714 = vmatprep.subr.bf16.mxu0 0
          %715 = vmatpush1.bf16.msra.mxu0 0
          %716 = vmatprep.subr.bf16.mxu0 0
          %717 = vmatpush1.bf16.msra.mxu0 0
          %718 = vmatprep.subr.bf16.mxu0 0
          %719 = vmatpush1.bf16.msra.mxu0 0
          %720 = vmatprep.mubr.bf16.mxu0 0
          %721 = vmatmul.mubr.bf16.gmra.mrb[0].mxu0 %v453
          %v722 = vpop.f32.mrb[0].mxu0
          %v723 = vadd.f32 0.0, %v722
          %v724 = vpop.f32.mrb[0].mxu0
          %v725 = vpop.f32.mrb[0].mxu0
          %v726 = vpop.f32.mrb[0].mxu0
          %727 = vdwg.mxu0
          %v728 = vadd.f32 %v679, %v723
          %729 = vst [vmem:[#allocation2] sm:$0xff] %v728
        $region60: #{tpu_custom_call.1} parent=43 // pred_fallthru
          _
        // Predicated region
        $region61: #{tpu_custom_call.1} parent=43 // pred_check
          %p730 = pneg %p430
        $region62: #{tpu_custom_call.1} parent=43 // pred_check_branch
          %732 = sbr.rel (%p730) target = $region64
        $region63: #{tpu_custom_call.1} parent=43 // pred_region
          %v733 = vld [vmem:[%s428] sm:$0xff]
          %v734 = vpack.c.bf16 %v733, %v733
          %v735 = vld [vmem:[%s6] sm:$0xf]
          %vm736 = vcmask 64512
          %v738 = vsel %vm736, %v734, 0
          %vm740 = vcmask 1043456
          %v742 = vsel %vm740, %v735, 0
          %744 = vmatprep.subr.bf16.mxu0 0
          %745 = vmatpush1.bf16.msra.mxu0 %v742
          %746 = vmatprep.subr.bf16.mxu0 0
          %747 = vmatpush1.bf16.msra.mxu0 0
          %748 = vmatprep.subr.bf16.mxu0 0
          %749 = vmatpush1.bf16.msra.mxu0 0
          %750 = vmatprep.subr.bf16.mxu0 0
          %751 = vmatpush1.bf16.msra.mxu0 0
          %752 = vmatprep.subr.bf16.mxu0 0
          %753 = vmatpush1.bf16.msra.mxu0 0
          %754 = vmatprep.subr.bf16.mxu0 0
          %755 = vmatpush1.bf16.msra.mxu0 0
          %756 = vmatprep.subr.bf16.mxu0 0
          %757 = vmatpush1.bf16.msra.mxu0 0
          %758 = vmatprep.subr.bf16.mxu0 0
          %759 = vmatpush1.bf16.msra.mxu0 0
          %760 = vmatprep.subr.bf16.mxu0 0
          %761 = vmatpush1.bf16.msra.mxu0 0
          %762 = vmatprep.subr.bf16.mxu0 0
          %763 = vmatpush1.bf16.msra.mxu0 0
          %764 = vmatprep.subr.bf16.mxu0 0
          %765 = vmatpush1.bf16.msra.mxu0 0
          %766 = vmatprep.subr.bf16.mxu0 0
          %767 = vmatpush1.bf16.msra.mxu0 0
          %768 = vmatprep.subr.bf16.mxu0 0
          %769 = vmatpush1.bf16.msra.mxu0 0
          %770 = vmatprep.subr.bf16.mxu0 0
          %771 = vmatpush1.bf16.msra.mxu0 0
          %772 = vmatprep.subr.bf16.mxu0 0
          %773 = vmatpush1.bf16.msra.mxu0 0
          %774 = vmatprep.subr.bf16.mxu0 0
          %775 = vmatpush1.bf16.msra.mxu0 0
          %776 = vmatprep.mubr.bf16.mxu0 0
          %777 = vmatmul.mubr.bf16.gmra.mrb[0].mxu0 %v738
          %v778 = vpop.f32.mrb[0].mxu0
          %v779 = vadd.f32 0.0, %v778
          %v780 = vpop.f32.mrb[0].mxu0
          %v781 = vpop.f32.mrb[0].mxu0
          %v782 = vpop.f32.mrb[0].mxu0
          %783 = vdwg.mxu0
          %v784 = vld [vmem:[#allocation2] sm:$0xff]
          %v785 = vadd.f32 %v784, %v779
          %v786 = vld [vmem:[%s7] sm:$0x1]
          %v788 = vlaneseq
          %v789 = vshrl.u32 %v788, 7
          %v790 = vsub.s32 0, %v789
          %v791 = vrot.slane %v786, %v790
          %v793 = vadd.f32 %v785, %v791
          %794 = vst [vmem:[%s396] sm:$0xff] %v793
        $region64: #{tpu_custom_call.1} parent=43 // pred_fallthru
          _
        %s795 = sand.u32 %s229, 1
        %s796 = scalar_lea.sflag [#allocation8], %s795
        %s797 = sand.u32 %s229, 1
        %s798 = smul.addr %s797, 8
        %s799 = scalar_lea.vmem [#allocation11], %s798
        // Predicated region
        $region65: #{tpu_custom_call.1} parent=43 // pred_check
          %p800 = pneg %p239
        $region66: #{tpu_custom_call.1} parent=43 // pred_check_branch
          %802 = sbr.rel (%p800) target = $region68
        $region67: #{tpu_custom_call.1} parent=43 // pred_region
          %s804 = ssub.s32 128, 128
          %805 = vsyncadd %s796, %s804
          %s806 = smul.addr %s40, 128
          %s807 = scalar_lea.hbm %s8, %s806
          %s809 = sshll.u32 %s799, 4
          %s810 = int_to_ptr.vmem [resolvable:$true] %s809
          %812 = dma.vmem_to_hbm [thread:$0]  %s810, 128, %s807, %s796
        $region68: #{tpu_custom_call.1} parent=43 // pred_fallthru
          _
      $region44: #{tpu_custom_call.1} parent=5 // pred_fallthru
        _
      %p813 = scmp.le.s32.totalorder 2, %s31
      // Predicated region
      $region69: #{tpu_custom_call.1} parent=5 // pred_check
        %p814 = pneg %p813
      $region70: #{tpu_custom_call.1} parent=5 // pred_check_branch
        %816 = sbr.rel (%p814) target = $region72
      $region71: #{tpu_custom_call.1} parent=5 // pred_region
        %s817 = ssub.s32 %s31, 2
        // Predicated region
        $region73: #{tpu_custom_call.1} parent=71 // pred_check
          %p818 = pneg %p245
        $region74: #{tpu_custom_call.1} parent=71 // pred_check_branch
          %820 = sbr.rel (%p818) target = $region76
        $region75: #{tpu_custom_call.1} parent=71 // pred_region
          %s821 = sand.u32 %s230, 1
          %s822 = scalar_lea.sflag [#allocation8], %s821
          %s823 = sand.u32 %s230, 1
          %s824 = smul.addr %s823, 8
          %s825 = scalar_lea.vmem [#allocation11], %s824
          %826 = dma.done %s822, 128
        $region76: #{tpu_custom_call.1} parent=71 // pred_fallthru
          _
      $region72: #{tpu_custom_call.1} parent=5 // pred_fallthru
        _
    $region6: #{tpu_custom_call.1} parent=1 // loop_footer
      %s35 = sadd.s32 1, %s31
    $region7: #{tpu_custom_call.1} parent=1 // loop_footer_branch
      %30 = sbr.rel target = $region3
    $region8: #{tpu_custom_call.1} parent=1 // loop_exit
      _
    %827 = vsyncpa [#allocation7], 1
    %s828 = scalar_lea.sflag [#allocation7], 1
    %829 = vsyncpa %s828, 1
    %830 = vsyncpa [#allocation10], 1
    %831 = vsyncpa [#allocation8], 1
    %s832 = scalar_lea.sflag [#allocation8], 1
    %833 = vsyncpa %s832, 1

</llo_original>
